<compile_context>
chip_gen: v6e
topology: v6e:2x2x1
jax: 0.10.0
libtpu: 0.0.40
codegen_flags: <defaults>
</compile_context>

<pallas_src>
import jax
import jax.numpy as jnp
from jax.experimental import pallas as pl
from jax.experimental.pallas import tpu as pltpu

BN_EPS = 1e-5          # PyTorch BatchNorm1d default
OUT_CLASSES = 40


# ---------------------------------------------------------------------------
# Pallas kernel:
#   h  = pt_base @ W1[:512] + mesh_base @ W1[512:] + b1          (B,256) f32
#   BN (training-mode batch stats, biased var, two-pass) -> ReLU
#   out = hr @ W2 + b2                                           (B,40)  f32
# ---------------------------------------------------------------------------
def fused_pred_kernel(pt_ref, mesh_ref, w1a_ref, w1b_ref, b1_ref,
                      gamma_ref, beta_ref, w2_ref, b2_ref, out_ref):
    inv_b = 1.0 / pt_ref.shape[0]

    # GEMM 1 over the (folded) concat: bf16 operands, f32 accumulation.
    a = pt_ref[...].astype(jnp.bfloat16)
    b = mesh_ref[...].astype(jnp.bfloat16)
    h = (jnp.dot(a, w1a_ref[...], preferred_element_type=jnp.float32)
         + jnp.dot(b, w1b_ref[...], preferred_element_type=jnp.float32)
         + b1_ref[...])                                            # (B,256) f32

    # BatchNorm1d, training-mode batch statistics, two-pass variance
    # (numerically robust; biased variance like nn.BatchNorm1d normalization).
    # TODO(synk): eval-mode BN (running_mean/running_var) would take the
    #             running stats as two extra (1,256) inputs instead.
    mean = jnp.sum(h, axis=0, keepdims=True) * inv_b               # (1,256)
    centered = h - mean                                            # (B,256)
    var = jnp.sum(centered * centered, axis=0, keepdims=True) * inv_b
    scale = gamma_ref[...] * jax.lax.rsqrt(var + BN_EPS)           # (1,256)
    hr = jnp.maximum(centered * scale + beta_ref[...], 0.0)        # BN+ReLU f32

    # GEMM 2: bf16 operands, f32 accumulation; writes (B,40) logits directly.
    out = jnp.dot(hr.astype(jnp.bfloat16), w2_ref[...],
                  preferred_element_type=jnp.float32) + b2_ref[...]
    out_ref[...] = out.astype(out_ref.dtype)


def fused_pred_pallas(pt_base, mesh_base, pred_params):
    w1a, w1b, b1, gamma, beta, w2, b2 = pred_params
    B = pt_base.shape[0]
    vmem = pl.BlockSpec(memory_space=pltpu.MemorySpace.VMEM)
    return pl.pallas_call(
        fused_pred_kernel,
        out_shape=jax.ShapeDtypeStruct((B, OUT_CLASSES), jnp.float32),
        in_specs=[vmem] * 9,
        out_specs=vmem,
    )(pt_base, mesh_base, w1a, w1b, b1, gamma, beta, w2, b2)


# ---------------------------------------------------------------------------
# Deterministic parameter construction for the `pred` head
# ---------------------------------------------------------------------------
def make_pred_params(key):
    k1, k2, k3, k4 = jax.random.split(key, 4)
    w1 = jax.random.normal(k1, (1024, 256), jnp.float32) * 0.02
    b1 = jax.random.normal(k2, (1, 256), jnp.float32) * 0.02
    gamma = jnp.ones((1, 256), jnp.float32)
    beta = jnp.zeros((1, 256), jnp.float32)
    w2 = jax.random.normal(k3, (256, OUT_CLASSES), jnp.float32) * 0.02
    b2 = jax.random.normal(k4, (1, OUT_CLASSES), jnp.float32) * 0.02
    # Split W1 along K so the kernel consumes the two concat halves directly.
    w1a = w1[:512, :].astype(jnp.bfloat16)
    w1b = w1[512:, :].astype(jnp.bfloat16)
    return (w1a, w1b, b1, gamma, beta, w2.astype(jnp.bfloat16), b2)


# ---------------------------------------------------------------------------
# Backbone stand-ins (plain JAX glue — architectures are external to Semi3D).
# TODO(synk): img_net / cloud_net / meshnet are constructor-injected modules
#             with no definition in this file; replaced by deterministic stubs
#             producing (pred(B,40), feat(B,1024), base(B,512)).  Their tail
#             GEMMs could be fused into the Pallas call once real nets exist.
# ---------------------------------------------------------------------------
def make_backbone_params(key, in_ch):
    k1, k2, k3 = jax.random.split(key, 3)
    w_base = jax.random.normal(k1, (in_ch, 512), jnp.float32) * 0.05
    w_feat = jax.random.normal(k2, (512, 1024), jnp.float32) * 0.05
    w_pred = jax.random.normal(k3, (1024, 40), jnp.float32) * 0.05
    return (w_base, w_feat, w_pred)


def backbone_stub(params, x_bcn):
    """x_bcn: (B, C, N) point-like features -> (pred, feat, base)."""
    w_base, w_feat, w_pred = params
    per_pt = jnp.einsum("bcn,cf->bnf", x_bcn, w_base)       # (B, N, 512)
    base = jnp.max(per_pt, axis=1)                           # (B, 512) global pool
    feat = jnp.maximum(base @ w_feat, 0.0)                   # (B, 1024)
    pred = feat @ w_pred                                     # (B, 40)
    return pred, feat, base


def cloud_net_stub(params, pt):
    return backbone_stub(params, pt)


def meshnet_stub(params, centers, corners, normals, neighbor_index):
    x = jnp.concatenate([centers, corners, normals], axis=1)    # (B, 15, F)
    return backbone_stub(params, x)


def img_net_stub(params, img, imgV):
    B = img.shape[0]
    x = jnp.concatenate([img.reshape(B, img.shape[1], -1),
                         imgV.reshape(B, imgV.shape[1], -1)], axis=1)  # (B, 6, H*W)
    return backbone_stub(params, x)


# ---------------------------------------------------------------------------
# Semi3D forward
# ---------------------------------------------------------------------------
def semi3d_forward(params, pt, img, imgV, centers, corners, normals, neighbor_index):
    pt_pred, pt_feat, pt_base = cloud_net_stub(params["cloud"], pt)
    mesh_pred, mesh_feat, mesh_base = meshnet_stub(
        params["mesh"], centers, corners, normals, neighbor_index)
    img_pred, img_feat, img_base = img_net_stub(params["img"], img, imgV)

    # Fused prediction head: single Pallas kernel (concat + Linear + BN + ReLU
    # + Linear); concat/cast and output slice are folded into the kernel.
    fused_pred = fused_pred_pallas(pt_base, mesh_base, params["pred"])

    return pt_pred, mesh_pred, img_pred, fused_pred, pt_feat, mesh_feat, img_feat


semi3d_forward_jit = jax.jit(semi3d_forward)


if __name__ == "__main__":
    key = jax.random.PRNGKey(0)
    kp, ki, kv, kc, kq, kn, kcl, kms, kim, kpr = jax.random.split(key, 10)

    B, N_PTS, N_FACES, H = 8, 64, 128, 16

    # Inputs (NCHW for images, channel-first for point/mesh features).
    pt = jax.random.normal(kp, (B, 3, N_PTS), jnp.float32)
    img = jax.random.normal(ki, (B, 3, H, H), jnp.float32)       # NCHW
    imgV = jax.random.normal(kv, (B, 3, H, H), jnp.float32)      # NCHW
    centers = jax.random.normal(kc, (B, 3, N_FACES), jnp.float32)
    corners = jax.random.normal(kq, (B, 9, N_FACES), jnp.float32)
    normals = jax.random.normal(kn, (B, 3, N_FACES), jnp.float32)
    neighbor_index = jax.random.randint(key, (B, N_FACES, 3), 0, N_FACES)

    params = {
        "cloud": make_backbone_params(kcl, 3),
        "mesh": make_backbone_params(kms, 15),
        "img": make_backbone_params(kim, 6),
        "pred": make_pred_params(kpr),
    }

    outs = semi3d_forward_jit(params, pt, img, imgV, centers, corners,
                              normals, neighbor_index)
    outs = jax.block_until_ready(outs)

    pt_pred, mesh_pred, img_pred, fused_pred, pt_feat, mesh_feat, img_feat = outs
    assert fused_pred.shape == (B, OUT_CLASSES)
    assert pt_pred.shape == (B, 40) and mesh_pred.shape == (B, 40)
    assert img_pred.shape == (B, 40)
    assert pt_feat.shape == (B, 1024) and mesh_feat.shape == (B, 1024)
    assert bool(jnp.all(jnp.isfinite(fused_pred)))

    print("KERNEL_OK")
</pallas_src>

<mosaic_0001>
module attributes {stable_mosaic.version = 11 : i64} {
  func.func @fused_pred_kernel(%arg0: memref<8x512xf32, #tpu.memory_space<vmem>>, %arg1: memref<8x512xf32, #tpu.memory_space<vmem>>, %arg2: memref<512x256xbf16, #tpu.memory_space<vmem>>, %arg3: memref<512x256xbf16, #tpu.memory_space<vmem>>, %arg4: memref<1x256xf32, #tpu.memory_space<vmem>>, %arg5: memref<1x256xf32, #tpu.memory_space<vmem>>, %arg6: memref<1x256xf32, #tpu.memory_space<vmem>>, %arg7: memref<256x40xbf16, #tpu.memory_space<vmem>>, %arg8: memref<1x40xf32, #tpu.memory_space<vmem>>, %arg9: memref<8x40xf32, #tpu.memory_space<vmem>>) attributes {dimension_semantics = [], scalar_prefetch = 0 : i64, scratch_operands = 0 : i64, tpu.core_type = #tpu.core_type<tc>} {
    %c0 = arith.constant 0 : index
    %c0_0 = arith.constant 0 : index
    %0 = vector.load %arg0[%c0, %c0_0] : memref<8x512xf32, #tpu.memory_space<vmem>>, vector<8x512xf32>
    %1 = arith.truncf %0 : vector<8x512xf32> to vector<8x512xbf16>
    %c0_1 = arith.constant 0 : index
    %c0_2 = arith.constant 0 : index
    %2 = vector.load %arg1[%c0_1, %c0_2] : memref<8x512xf32, #tpu.memory_space<vmem>>, vector<8x512xf32>
    %3 = arith.truncf %2 : vector<8x512xf32> to vector<8x512xbf16>
    %c0_3 = arith.constant 0 : index
    %c0_4 = arith.constant 0 : index
    %4 = vector.load %arg2[%c0_3, %c0_4] : memref<512x256xbf16, #tpu.memory_space<vmem>>, vector<512x256xbf16>
    %cst = arith.constant dense<0.000000e+00> : vector<8x256xf32>
    %5 = tpu.matmul %1, %4, %cst {dimension_numbers = #tpu.dot_dimension_numbers<[1], [0], [0], [1], [0, 0, 1, 1], [], []>} : vector<8x512xbf16>, vector<512x256xbf16>, vector<8x256xf32> -> vector<8x256xf32>
    %c0_5 = arith.constant 0 : index
    %c0_6 = arith.constant 0 : index
    %6 = vector.load %arg3[%c0_5, %c0_6] : memref<512x256xbf16, #tpu.memory_space<vmem>>, vector<512x256xbf16>
    %cst_7 = arith.constant dense<0.000000e+00> : vector<8x256xf32>
    %7 = tpu.matmul %3, %6, %cst_7 {dimension_numbers = #tpu.dot_dimension_numbers<[1], [0], [0], [1], [0, 0, 1, 1], [], []>} : vector<8x512xbf16>, vector<512x256xbf16>, vector<8x256xf32> -> vector<8x256xf32>
    %8 = arith.addf %5, %7 : vector<8x256xf32>
    %c0_8 = arith.constant 0 : index
    %c0_9 = arith.constant 0 : index
    %9 = vector.load %arg4[%c0_8, %c0_9] : memref<1x256xf32, #tpu.memory_space<vmem>>, vector<1x256xf32>
    %10 = vector.broadcast %9 : vector<1x256xf32> to vector<8x256xf32>
    %11 = arith.addf %8, %10 : vector<8x256xf32>
    %cst_10 = arith.constant dense<0.000000e+00> : vector<256xf32>
    %12 = vector.multi_reduction <add>, %11, %cst_10 [0] : vector<8x256xf32> to vector<256xf32>
    %13 = vector.shape_cast %12 : vector<256xf32> to vector<1x256xf32>
    %cst_11 = arith.constant 1.250000e-01 : f32
    %14 = vector.broadcast %cst_11 : f32 to vector<1x256xf32>
    %15 = arith.mulf %13, %14 : vector<1x256xf32>
    %16 = vector.broadcast %15 : vector<1x256xf32> to vector<8x256xf32>
    %17 = arith.subf %11, %16 : vector<8x256xf32>
    %18 = arith.mulf %17, %17 : vector<8x256xf32>
    %cst_12 = arith.constant dense<0.000000e+00> : vector<256xf32>
    %19 = vector.multi_reduction <add>, %18, %cst_12 [0] : vector<8x256xf32> to vector<256xf32>
    %20 = vector.shape_cast %19 : vector<256xf32> to vector<1x256xf32>
    %cst_13 = arith.constant 1.250000e-01 : f32
    %21 = vector.broadcast %cst_13 : f32 to vector<1x256xf32>
    %22 = arith.mulf %20, %21 : vector<1x256xf32>
    %c0_14 = arith.constant 0 : index
    %c0_15 = arith.constant 0 : index
    %23 = vector.load %arg5[%c0_14, %c0_15] : memref<1x256xf32, #tpu.memory_space<vmem>>, vector<1x256xf32>
    %cst_16 = arith.constant 9.99999974E-6 : f32
    %24 = vector.broadcast %cst_16 : f32 to vector<1x256xf32>
    %25 = arith.addf %22, %24 : vector<1x256xf32>
    %26 = math.rsqrt %25 : vector<1x256xf32>
    %27 = arith.mulf %23, %26 : vector<1x256xf32>
    %28 = vector.broadcast %27 : vector<1x256xf32> to vector<8x256xf32>
    %29 = arith.mulf %17, %28 : vector<8x256xf32>
    %c0_17 = arith.constant 0 : index
    %c0_18 = arith.constant 0 : index
    %30 = vector.load %arg6[%c0_17, %c0_18] : memref<1x256xf32, #tpu.memory_space<vmem>>, vector<1x256xf32>
    %31 = vector.broadcast %30 : vector<1x256xf32> to vector<8x256xf32>
    %32 = arith.addf %29, %31 : vector<8x256xf32>
    %cst_19 = arith.constant 0.000000e+00 : f32
    %33 = vector.broadcast %cst_19 : f32 to vector<8x256xf32>
    %34 = arith.maximumf %32, %33 : vector<8x256xf32>
    %35 = arith.truncf %34 : vector<8x256xf32> to vector<8x256xbf16>
    %c0_20 = arith.constant 0 : index
    %c0_21 = arith.constant 0 : index
    %36 = vector.load %arg7[%c0_20, %c0_21] : memref<256x40xbf16, #tpu.memory_space<vmem>>, vector<256x40xbf16>
    %cst_22 = arith.constant dense<0.000000e+00> : vector<8x40xf32>
    %37 = tpu.matmul %35, %36, %cst_22 {dimension_numbers = #tpu.dot_dimension_numbers<[1], [0], [0], [1], [0, 0, 1, 1], [], []>} : vector<8x256xbf16>, vector<256x40xbf16>, vector<8x40xf32> -> vector<8x40xf32>
    %c0_23 = arith.constant 0 : index
    %c0_24 = arith.constant 0 : index
    %38 = vector.load %arg8[%c0_23, %c0_24] : memref<1x40xf32, #tpu.memory_space<vmem>>, vector<1x40xf32>
    %39 = vector.broadcast %38 : vector<1x40xf32> to vector<8x40xf32>
    %40 = arith.addf %37, %39 : vector<8x40xf32>
    %c0_25 = arith.constant 0 : index
    %c0_26 = arith.constant 0 : index
    %41 = vector.load %arg9[%c0_25, %c0_26] : memref<8x40xf32, #tpu.memory_space<vmem>>, vector<8x40xf32>
    tpu.vector_store %arg9[%c0_25, %c0_26], %40 {strides = array<i32>} : memref<8x40xf32, #tpu.memory_space<vmem>>, vector<8x40xf32>,
    return
  }
}

</mosaic_0001>

<llo_original>
// kernel: semi3d_forward.1
$region0: #{semi3d_forward.1}
  #allocation0 [shape = 'u32[]', space=smem, size = 0x4, offset = 0x4, fixed_abs, tag = 'smem constant byte address 0x4 - core index']
  #allocation1 [shape = 'u32[144,128]{1,0:T(1,128)}', space=vmem, size = 0x12000, scoped, tag = 'internal scratch']
  %s0 = inlined_call_operand.vmem [shape: f32[8,512], index: 0, kind: input, shape index: {}]
  %s1 = inlined_call_operand.vmem [shape: f32[8,512], index: 1, kind: input, shape index: {}]
  %s2 = inlined_call_operand.hbm [shape: bf16[512,256], index: 2, kind: input, shape index: {}]
  %s3 = inlined_call_operand.hbm [shape: bf16[512,256], index: 3, kind: input, shape index: {}]
  %s4 = inlined_call_operand.hbm [shape: f32[1,256], index: 4, kind: input, shape index: {}]
  %s5 = inlined_call_operand.hbm [shape: f32[1,256], index: 5, kind: input, shape index: {}]
  %s6 = inlined_call_operand.hbm [shape: f32[1,256], index: 6, kind: input, shape index: {}]
  %s7 = inlined_call_operand.vmem [shape: bf16[256,40], index: 7, kind: input, shape index: {}]
  %s8 = inlined_call_operand.hbm [shape: f32[1,40], index: 8, kind: input, shape index: {}]
  %s9 = inlined_call_operand.hbm [shape: f32[8,40], index: 9, kind: output, shape index: {}]
  %s10 = sld [smem:[#allocation0]]
  $region70: #{semi3d_forward.1} parent=0
    _
  %s12 = ssub.s32 1, %s10
  %s13 = scalar_select 0, %s12, %s10
  $region1: #{semi3d_forward.1} parent=0
    #allocation2 [shape = 'u8[262144]{0}', space=vmem, size = 0x40000, scoped, tag = 'input window, operand 2, single buffered']
    #allocation3 [shape = 's32[1]{0}', space=sflag, size = 0x4, scoped, tag = 'scoped memory for semi3d_forward.1']
    #allocation4 [shape = 's32[1]{0}', space=sflag, size = 0x4, scoped, tag = 'scoped memory for semi3d_forward.1']
    #allocation5 [shape = 'u8[262144]{0}', space=vmem, size = 0x40000, scoped, tag = 'input window, operand 3, single buffered']
    #allocation6 [shape = 's32[1]{0}', space=sflag, size = 0x4, scoped, tag = 'scoped memory for semi3d_forward.1']
    #allocation7 [shape = 'u8[1024]{0}', space=vmem, size = 0x400, scoped, tag = 'input window, operand 4, single buffered']
    #allocation8 [shape = 'u8[1024]{0}', space=vmem, size = 0x400, scoped, tag = 'input window, operand 5, single buffered']
    #allocation9 [shape = 's32[1]{0}', space=sflag, size = 0x4, scoped, tag = 'scoped memory for semi3d_forward.1']
    #allocation10 [shape = 'u8[1024]{0}', space=vmem, size = 0x400, scoped, tag = 'input window, operand 6, single buffered']
    #allocation11 [shape = 'u8[512]{0}', space=vmem, size = 0x400, scoped, tag = 'input window, operand 8, single buffered']
    #allocation12 [shape = 's32[1]{0}', space=sflag, size = 0x4, scoped, tag = 'scoped memory for semi3d_forward.1']
    #allocation13 [shape = 'u8[4096]{0}', space=vmem, size = 0x1000, scoped, tag = 'output window, operand 0, single buffered']
    %14 = vsyncpa [#allocation3], 0
    %15 = vsyncpa [#allocation6], 0
    %16 = vsyncpa [#allocation9], 0
    %17 = vsyncpa [#allocation12], 0
    %18 = vsyncpa [#allocation4], 0
    // Predicated region
    $region2: #{semi3d_forward.1} parent=1 // pred_check
      _
    $region3: #{semi3d_forward.1} parent=1 // pred_check_branch
      %20 = sbr.rel (0) target = $region5
    $region4: #{semi3d_forward.1} parent=1 // pred_region
      _
    $region5: #{semi3d_forward.1} parent=1 // pred_fallthru
      _
    // Predicated region
    $region6: #{semi3d_forward.1} parent=1 // pred_check
      _
    $region7: #{semi3d_forward.1} parent=1 // pred_check_branch
      %22 = sbr.rel (0) target = $region9
    $region8: #{semi3d_forward.1} parent=1 // pred_region
      _
    $region9: #{semi3d_forward.1} parent=1 // pred_fallthru
      _
    // Predicated region
    $region10: #{semi3d_forward.1} parent=1 // pred_check
      _
    $region11: #{semi3d_forward.1} parent=1 // pred_check_branch
      %24 = sbr.rel (0) target = $region13
    $region12: #{semi3d_forward.1} parent=1 // pred_region
      %s26 = ssub.s32 8192, 8192
      %27 = vsyncadd [#allocation3], %s26
      %s28 = sshll.u32 [#allocation2], 4
      %s29 = int_to_ptr.vmem [resolvable:$true] %s28
      %34 = dma.hbm_to_vmem [thread:$0]  %s2, 8192, %s29, [#allocation3], 128, 128, 8
    $region13: #{semi3d_forward.1} parent=1 // pred_fallthru
      _
    // Predicated region
    $region14: #{semi3d_forward.1} parent=1 // pred_check
      _
    $region15: #{semi3d_forward.1} parent=1 // pred_check_branch
      %36 = sbr.rel (0) target = $region17
    $region16: #{semi3d_forward.1} parent=1 // pred_region
      %s38 = ssub.s32 8192, 8192
      %39 = vsyncadd [#allocation6], %s38
      %s40 = sshll.u32 [#allocation5], 4
      %s41 = int_to_ptr.vmem [resolvable:$true] %s40
      %46 = dma.hbm_to_vmem [thread:$0]  %s3, 8192, %s41, [#allocation6], 128, 128, 8
    $region17: #{semi3d_forward.1} parent=1 // pred_fallthru
      _
    // Predicated region
    $region18: #{semi3d_forward.1} parent=1 // pred_check
      _
    $region19: #{semi3d_forward.1} parent=1 // pred_check_branch
      %48 = sbr.rel (0) target = $region21
    $region20: #{semi3d_forward.1} parent=1 // pred_region
      %s50 = ssub.s32 32, 32
      %51 = vsyncadd [#allocation6], %s50
      %s53 = sshll.u32 [#allocation7], 4
      %s54 = int_to_ptr.vmem [resolvable:$true] %s53
      %56 = dma.hbm_to_vmem [thread:$0]  %s4, 32, %s54, [#allocation6]
    $region21: #{semi3d_forward.1} parent=1 // pred_fallthru
      _
    // Predicated region
    $region22: #{semi3d_forward.1} parent=1 // pred_check
      _
    $region23: #{semi3d_forward.1} parent=1 // pred_check_branch
      %58 = sbr.rel (0) target = $region25
    $region24: #{semi3d_forward.1} parent=1 // pred_region
      %s60 = ssub.s32 32, 32
      %61 = vsyncadd [#allocation9], %s60
      %s63 = sshll.u32 [#allocation8], 4
      %s64 = int_to_ptr.vmem [resolvable:$true] %s63
      %66 = dma.hbm_to_vmem [thread:$0]  %s5, 32, %s64, [#allocation9]
    $region25: #{semi3d_forward.1} parent=1 // pred_fallthru
      _
    // Predicated region
    $region26: #{semi3d_forward.1} parent=1 // pred_check
      _
    $region27: #{semi3d_forward.1} parent=1 // pred_check_branch
      %68 = sbr.rel (0) target = $region29
    $region28: #{semi3d_forward.1} parent=1 // pred_region
      %s70 = ssub.s32 32, 32
      %71 = vsyncadd [#allocation9], %s70
      %s73 = sshll.u32 [#allocation10], 4
      %s74 = int_to_ptr.vmem [resolvable:$true] %s73
      %76 = dma.hbm_to_vmem [thread:$0]  %s6, 32, %s74, [#allocation9]
    $region29: #{semi3d_forward.1} parent=1 // pred_fallthru
      _
    // Predicated region
    $region30: #{semi3d_forward.1} parent=1 // pred_check
      _
    $region31: #{semi3d_forward.1} parent=1 // pred_check_branch
      %78 = sbr.rel (0) target = $region33
    $region32: #{semi3d_forward.1} parent=1 // pred_region
      _
    $region33: #{semi3d_forward.1} parent=1 // pred_fallthru
      _
    // Predicated region
    $region34: #{semi3d_forward.1} parent=1 // pred_check
      _
    $region35: #{semi3d_forward.1} parent=1 // pred_check_branch
      %80 = sbr.rel (0) target = $region37
    $region36: #{semi3d_forward.1} parent=1 // pred_region
      %s82 = ssub.s32 16, 16
      %83 = vsyncadd [#allocation12], %s82
      %s85 = sshll.u32 [#allocation11], 4
      %s86 = int_to_ptr.vmem [resolvable:$true] %s85
      %88 = dma.hbm_to_vmem [thread:$0]  %s8, 16, %s86, [#allocation12]
    $region37: #{semi3d_forward.1} parent=1 // pred_fallthru
      _
    // Predicated region
    $region38: #{semi3d_forward.1} parent=1 // pred_check
      _
    $region39: #{semi3d_forward.1} parent=1 // pred_check_branch
      %90 = sbr.rel (0) target = $region41
    $region40: #{semi3d_forward.1} parent=1 // pred_region
      %91 = dma.done [#allocation3], 8192
    $region41: #{semi3d_forward.1} parent=1 // pred_fallthru
      _
    // Predicated region
    $region42: #{semi3d_forward.1} parent=1 // pred_check
      _
    $region43: #{semi3d_forward.1} parent=1 // pred_check_branch
      %93 = sbr.rel (0) target = $region45
    $region44: #{semi3d_forward.1} parent=1 // pred_region
      %94 = dma.done [#allocation6], 8192
    $region45: #{semi3d_forward.1} parent=1 // pred_fallthru
      _
    // Predicated region
    $region46: #{semi3d_forward.1} parent=1 // pred_check
      _
    $region47: #{semi3d_forward.1} parent=1 // pred_check_branch
      %96 = sbr.rel (0) target = $region49
    $region48: #{semi3d_forward.1} parent=1 // pred_region
      %97 = dma.done [#allocation6], 32
    $region49: #{semi3d_forward.1} parent=1 // pred_fallthru
      _
    // Predicated region
    $region50: #{semi3d_forward.1} parent=1 // pred_check
      _
    $region51: #{semi3d_forward.1} parent=1 // pred_check_branch
      %99 = sbr.rel (0) target = $region53
    $region52: #{semi3d_forward.1} parent=1 // pred_region
      %100 = dma.done [#allocation9], 32
    $region53: #{semi3d_forward.1} parent=1 // pred_fallthru
      _
    // Predicated region
    $region54: #{semi3d_forward.1} parent=1 // pred_check
      _
    $region55: #{semi3d_forward.1} parent=1 // pred_check_branch
      %102 = sbr.rel (0) target = $region57
    $region56: #{semi3d_forward.1} parent=1 // pred_region
      %103 = dma.done [#allocation9], 32
    $region57: #{semi3d_forward.1} parent=1 // pred_fallthru
      _
    // Predicated region
    $region58: #{semi3d_forward.1} parent=1 // pred_check
      _
    $region59: #{semi3d_forward.1} parent=1 // pred_check_branch
      %105 = sbr.rel (0) target = $region61
    $region60: #{semi3d_forward.1} parent=1 // pred_region
      %106 = dma.done [#allocation12], 16
    $region61: #{semi3d_forward.1} parent=1 // pred_fallthru
      _
    %v108 = vld [vmem:[%s0] sm:$0xff]
    %v109 = vld [vmem:[%s0 + $0x8] sm:$0xff]
    %v110 = vld [vmem:[%s0 + $0x10] sm:$0xff]
    %v111 = vld [vmem:[%s0 + $0x18] sm:$0xff]
    %v112 = vpack.c.bf16 %v108, %v108
    %v113 = vpack.c.bf16 %v109, %v109
    %v114 = vpack.c.bf16 %v110, %v110
    %v115 = vpack.c.bf16 %v111, %v111
    %v116 = vld [vmem:[%s1] sm:$0xff]
    %v117 = vld [vmem:[%s1 + $0x8] sm:$0xff]
    %v118 = vld [vmem:[%s1 + $0x10] sm:$0xff]
    %v119 = vld [vmem:[%s1 + $0x18] sm:$0xff]
    %v120 = vpack.c.bf16 %v116, %v116
    %v121 = vpack.c.bf16 %v117, %v117
    %v122 = vpack.c.bf16 %v118, %v118
    %v123 = vpack.c.bf16 %v119, %v119
    %v124 = vld [vmem:[#allocation2] sm:$0xff]
    %v125 = vld [vmem:[#allocation2 + $0x8] sm:$0xff]
    %v126 = vld [vmem:[#allocation2 + $0x10] sm:$0xff]
    %v127 = vld [vmem:[#allocation2 + $0x18] sm:$0xff]
    %v128 = vld [vmem:[#allocation2 + $0x20] sm:$0xff]
    %v129 = vld [vmem:[#allocation2 + $0x28] sm:$0xff]
    %v130 = vld [vmem:[#allocation2 + $0x30] sm:$0xff]
    %v131 = vld [vmem:[#allocation2 + $0x38] sm:$0xff]
    %v132 = vld [vmem:[#allocation2 + $0x40] sm:$0xff]
    %v133 = vld [vmem:[#allocation2 + $0x48] sm:$0xff]
    %v134 = vld [vmem:[#allocation2 + $0x50] sm:$0xff]
    %v135 = vld [vmem:[#allocation2 + $0x58] sm:$0xff]
    %v136 = vld [vmem:[#allocation2 + $0x60] sm:$0xff]
    %v137 = vld [vmem:[#allocation2 + $0x68] sm:$0xff]
    %v138 = vld [vmem:[#allocation2 + $0x70] sm:$0xff]
    %v139 = vld [vmem:[#allocation2 + $0x78] sm:$0xff]
    %v140 = vld [vmem:[#allocation2 + $0x80] sm:$0xff]
    %v141 = vld [vmem:[#allocation2 + $0x88] sm:$0xff]
    %v142 = vld [vmem:[#allocation2 + $0x90] sm:$0xff]
    %v143 = vld [vmem:[#allocation2 + $0x98] sm:$0xff]
    %v144 = vld [vmem:[#allocation2 + $0xa0] sm:$0xff]
    %v145 = vld [vmem:[#allocation2 + $0xa8] sm:$0xff]
    %v146 = vld [vmem:[#allocation2 + $0xb0] sm:$0xff]
    %v147 = vld [vmem:[#allocation2 + $0xb8] sm:$0xff]
    %v148 = vld [vmem:[#allocation2 + $0xc0] sm:$0xff]
    %v149 = vld [vmem:[#allocation2 + $0xc8] sm:$0xff]
    %v150 = vld [vmem:[#allocation2 + $0xd0] sm:$0xff]
    %v151 = vld [vmem:[#allocation2 + $0xd8] sm:$0xff]
    %v152 = vld [vmem:[#allocation2 + $0xe0] sm:$0xff]
    %v153 = vld [vmem:[#allocation2 + $0xe8] sm:$0xff]
    %v154 = vld [vmem:[#allocation2 + $0xf0] sm:$0xff]
    %v155 = vld [vmem:[#allocation2 + $0xf8] sm:$0xff]
    %v156 = vld [vmem:[#allocation2 + $0x100] sm:$0xff]
    %v157 = vld [vmem:[#allocation2 + $0x108] sm:$0xff]
    %v158 = vld [vmem:[#allocation2 + $0x110] sm:$0xff]
    %v159 = vld [vmem:[#allocation2 + $0x118] sm:$0xff]
    %v160 = vld [vmem:[#allocation2 + $0x120] sm:$0xff]
    %v161 = vld [vmem:[#allocation2 + $0x128] sm:$0xff]
    %v162 = vld [vmem:[#allocation2 + $0x130] sm:$0xff]
    %v163 = vld [vmem:[#allocation2 + $0x138] sm:$0xff]
    %v164 = vld [vmem:[#allocation2 + $0x140] sm:$0xff]
    %v165 = vld [vmem:[#allocation2 + $0x148] sm:$0xff]
    %v166 = vld [vmem:[#allocation2 + $0x150] sm:$0xff]
    %v167 = vld [vmem:[#allocation2 + $0x158] sm:$0xff]
    %v168 = vld [vmem:[#allocation2 + $0x160] sm:$0xff]
    %v169 = vld [vmem:[#allocation2 + $0x168] sm:$0xff]
    %v170 = vld [vmem:[#allocation2 + $0x170] sm:$0xff]
    %v171 = vld [vmem:[#allocation2 + $0x178] sm:$0xff]
    %v172 = vld [vmem:[#allocation2 + $0x180] sm:$0xff]
    %v173 = vld [vmem:[#allocation2 + $0x188] sm:$0xff]
    %v174 = vld [vmem:[#allocation2 + $0x190] sm:$0xff]
    %v175 = vld [vmem:[#allocation2 + $0x198] sm:$0xff]
    %v176 = vld [vmem:[#allocation2 + $0x1a0] sm:$0xff]
    %v177 = vld [vmem:[#allocation2 + $0x1a8] sm:$0xff]
    %v178 = vld [vmem:[#allocation2 + $0x1b0] sm:$0xff]
    %v179 = vld [vmem:[#allocation2 + $0x1b8] sm:$0xff]
    %v180 = vld [vmem:[#allocation2 + $0x1c0] sm:$0xff]
    %v181 = vld [vmem:[#allocation2 + $0x1c8] sm:$0xff]
    %v182 = vld [vmem:[#allocation2 + $0x1d0] sm:$0xff]
    %v183 = vld [vmem:[#allocation2 + $0x1d8] sm:$0xff]
    %v184 = vld [vmem:[#allocation2 + $0x1e0] sm:$0xff]
    %v185 = vld [vmem:[#allocation2 + $0x1e8] sm:$0xff]
    %v186 = vld [vmem:[#allocation2 + $0x1f0] sm:$0xff]
    %v187 = vld [vmem:[#allocation2 + $0x1f8] sm:$0xff]
    %v188 = vld [vmem:[#allocation5] sm:$0xff]
    %v189 = vld [vmem:[#allocation5 + $0x8] sm:$0xff]
    %v190 = vld [vmem:[#allocation5 + $0x10] sm:$0xff]
    %v191 = vld [vmem:[#allocation5 + $0x18] sm:$0xff]
    %v192 = vld [vmem:[#allocation5 + $0x20] sm:$0xff]
    %v193 = vld [vmem:[#allocation5 + $0x28] sm:$0xff]
    %v194 = vld [vmem:[#allocation5 + $0x30] sm:$0xff]
    %v195 = vld [vmem:[#allocation5 + $0x38] sm:$0xff]
    %v196 = vld [vmem:[#allocation5 + $0x40] sm:$0xff]
    %v197 = vld [vmem:[#allocation5 + $0x48] sm:$0xff]
    %v198 = vld [vmem:[#allocation5 + $0x50] sm:$0xff]
    %v199 = vld [vmem:[#allocation5 + $0x58] sm:$0xff]
    %v200 = vld [vmem:[#allocation5 + $0x60] sm:$0xff]
    %v201 = vld [vmem:[#allocation5 + $0x68] sm:$0xff]
    %v202 = vld [vmem:[#allocation5 + $0x70] sm:$0xff]
    %v203 = vld [vmem:[#allocation5 + $0x78] sm:$0xff]
    %v204 = vld [vmem:[#allocation5 + $0x80] sm:$0xff]
    %v205 = vld [vmem:[#allocation5 + $0x88] sm:$0xff]
    %v206 = vld [vmem:[#allocation5 + $0x90] sm:$0xff]
    %v207 = vld [vmem:[#allocation5 + $0x98] sm:$0xff]
    %v208 = vld [vmem:[#allocation5 + $0xa0] sm:$0xff]
    %v209 = vld [vmem:[#allocation5 + $0xa8] sm:$0xff]
    %v210 = vld [vmem:[#allocation5 + $0xb0] sm:$0xff]
    %v211 = vld [vmem:[#allocation5 + $0xb8] sm:$0xff]
    %v212 = vld [vmem:[#allocation5 + $0xc0] sm:$0xff]
    %v213 = vld [vmem:[#allocation5 + $0xc8] sm:$0xff]
    %v214 = vld [vmem:[#allocation5 + $0xd0] sm:$0xff]
    %v215 = vld [vmem:[#allocation5 + $0xd8] sm:$0xff]
    %v216 = vld [vmem:[#allocation5 + $0xe0] sm:$0xff]
    %v217 = vld [vmem:[#allocation5 + $0xe8] sm:$0xff]
    %v218 = vld [vmem:[#allocation5 + $0xf0] sm:$0xff]
    %v219 = vld [vmem:[#allocation5 + $0xf8] sm:$0xff]
    %v220 = vld [vmem:[#allocation5 + $0x100] sm:$0xff]
    %v221 = vld [vmem:[#allocation5 + $0x108] sm:$0xff]
    %v222 = vld [vmem:[#allocation5 + $0x110] sm:$0xff]
    %v223 = vld [vmem:[#allocation5 + $0x118] sm:$0xff]
    %v224 = vld [vmem:[#allocation5 + $0x120] sm:$0xff]
    %v225 = vld [vmem:[#allocation5 + $0x128] sm:$0xff]
    %v226 = vld [vmem:[#allocation5 + $0x130] sm:$0xff]
    %v227 = vld [vmem:[#allocation5 + $0x138] sm:$0xff]
    %v228 = vld [vmem:[#allocation5 + $0x140] sm:$0xff]
    %v229 = vld [vmem:[#allocation5 + $0x148] sm:$0xff]
    %v230 = vld [vmem:[#allocation5 + $0x150] sm:$0xff]
    %v231 = vld [vmem:[#allocation5 + $0x158] sm:$0xff]
    %v232 = vld [vmem:[#allocation5 + $0x160] sm:$0xff]
    %v233 = vld [vmem:[#allocation5 + $0x168] sm:$0xff]
    %v234 = vld [vmem:[#allocation5 + $0x170] sm:$0xff]
    %v235 = vld [vmem:[#allocation5 + $0x178] sm:$0xff]
    %v236 = vld [vmem:[#allocation5 + $0x180] sm:$0xff]
    %v237 = vld [vmem:[#allocation5 + $0x188] sm:$0xff]
    %v238 = vld [vmem:[#allocation5 + $0x190] sm:$0xff]
    %v239 = vld [vmem:[#allocation5 + $0x198] sm:$0xff]
    %v240 = vld [vmem:[#allocation5 + $0x1a0] sm:$0xff]
    %v241 = vld [vmem:[#allocation5 + $0x1a8] sm:$0xff]
    %v242 = vld [vmem:[#allocation5 + $0x1b0] sm:$0xff]
    %v243 = vld [vmem:[#allocation5 + $0x1b8] sm:$0xff]
    %v244 = vld [vmem:[#allocation5 + $0x1c0] sm:$0xff]
    %v245 = vld [vmem:[#allocation5 + $0x1c8] sm:$0xff]
    %v246 = vld [vmem:[#allocation5 + $0x1d0] sm:$0xff]
    %v247 = vld [vmem:[#allocation5 + $0x1d8] sm:$0xff]
    %v248 = vld [vmem:[#allocation5 + $0x1e0] sm:$0xff]
    %v249 = vld [vmem:[#allocation5 + $0x1e8] sm:$0xff]
    %v250 = vld [vmem:[#allocation5 + $0x1f0] sm:$0xff]
    %v251 = vld [vmem:[#allocation5 + $0x1f8] sm:$0xff]
    %v316 = vunpack.c.l.b16 %v188
    %v317 = vunpack.c.h.b16 %v188
    %v318 = vunpack.c.l.b16 %v189
    %v319 = vunpack.c.h.b16 %v189
    %v320 = vunpack.c.l.b16 %v190
    %v321 = vunpack.c.h.b16 %v190
    %v322 = vunpack.c.l.b16 %v191
    %v323 = vunpack.c.h.b16 %v191
    %v324 = vunpack.c.l.b16 %v192
    %v325 = vunpack.c.h.b16 %v192
    %v326 = vunpack.c.l.b16 %v193
    %v327 = vunpack.c.h.b16 %v193
    %v328 = vunpack.c.l.b16 %v194
    %v329 = vunpack.c.h.b16 %v194
    %v330 = vunpack.c.l.b16 %v195
    %v331 = vunpack.c.h.b16 %v195
    %v332 = vunpack.c.l.b16 %v196
    %v333 = vunpack.c.h.b16 %v196
    %v334 = vunpack.c.l.b16 %v197
    %v335 = vunpack.c.h.b16 %v197
    %v336 = vunpack.c.l.b16 %v198
    %v337 = vunpack.c.h.b16 %v198
    %v338 = vunpack.c.l.b16 %v199
    %v339 = vunpack.c.h.b16 %v199
    %v340 = vunpack.c.l.b16 %v200
    %v341 = vunpack.c.h.b16 %v200
    %v342 = vunpack.c.l.b16 %v201
    %v343 = vunpack.c.h.b16 %v201
    %v344 = vunpack.c.l.b16 %v202
    %v345 = vunpack.c.h.b16 %v202
    %v346 = vunpack.c.l.b16 %v203
    %v347 = vunpack.c.h.b16 %v203
    %v348 = vunpack.c.l.b16 %v204
    %v349 = vunpack.c.h.b16 %v204
    %v350 = vunpack.c.l.b16 %v205
    %v351 = vunpack.c.h.b16 %v205
    %v352 = vunpack.c.l.b16 %v206
    %v353 = vunpack.c.h.b16 %v206
    %v354 = vunpack.c.l.b16 %v207
    %v355 = vunpack.c.h.b16 %v207
    %v356 = vunpack.c.l.b16 %v208
    %v357 = vunpack.c.h.b16 %v208
    %v358 = vunpack.c.l.b16 %v209
    %v359 = vunpack.c.h.b16 %v209
    %v360 = vunpack.c.l.b16 %v210
    %v361 = vunpack.c.h.b16 %v210
    %v362 = vunpack.c.l.b16 %v211
    %v363 = vunpack.c.h.b16 %v211
    %v364 = vunpack.c.l.b16 %v212
    %v365 = vunpack.c.h.b16 %v212
    %v366 = vunpack.c.l.b16 %v213
    %v367 = vunpack.c.h.b16 %v213
    %v368 = vunpack.c.l.b16 %v214
    %v369 = vunpack.c.h.b16 %v214
    %v370 = vunpack.c.l.b16 %v215
    %v371 = vunpack.c.h.b16 %v215
    %v372 = vunpack.c.l.b16 %v216
    %v373 = vunpack.c.h.b16 %v216
    %v374 = vunpack.c.l.b16 %v217
    %v375 = vunpack.c.h.b16 %v217
    %v376 = vunpack.c.l.b16 %v218
    %v377 = vunpack.c.h.b16 %v218
    %v378 = vunpack.c.l.b16 %v219
    %v379 = vunpack.c.h.b16 %v219
    %v380 = vunpack.c.l.b16 %v220
    %v381 = vunpack.c.h.b16 %v220
    %v382 = vunpack.c.l.b16 %v221
    %v383 = vunpack.c.h.b16 %v221
    %v384 = vunpack.c.l.b16 %v222
    %v385 = vunpack.c.h.b16 %v222
    %v386 = vunpack.c.l.b16 %v223
    %v387 = vunpack.c.h.b16 %v223
    %v388 = vunpack.c.l.b16 %v224
    %v389 = vunpack.c.h.b16 %v224
    %v390 = vunpack.c.l.b16 %v225
    %v391 = vunpack.c.h.b16 %v225
    %v392 = vunpack.c.l.b16 %v226
    %v393 = vunpack.c.h.b16 %v226
    %v394 = vunpack.c.l.b16 %v227
    %v395 = vunpack.c.h.b16 %v227
    %v396 = vunpack.c.l.b16 %v228
    %v397 = vunpack.c.h.b16 %v228
    %v398 = vunpack.c.l.b16 %v229
    %v399 = vunpack.c.h.b16 %v229
    %v400 = vunpack.c.l.b16 %v230
    %v401 = vunpack.c.h.b16 %v230
    %v402 = vunpack.c.l.b16 %v231
    %v403 = vunpack.c.h.b16 %v231
    %v404 = vunpack.c.l.b16 %v232
    %v405 = vunpack.c.h.b16 %v232
    %v406 = vunpack.c.l.b16 %v233
    %v407 = vunpack.c.h.b16 %v233
    %v408 = vunpack.c.l.b16 %v234
    %v409 = vunpack.c.h.b16 %v234
    %v410 = vunpack.c.l.b16 %v235
    %v411 = vunpack.c.h.b16 %v235
    %v412 = vunpack.c.l.b16 %v236
    %v413 = vunpack.c.h.b16 %v236
    %v414 = vunpack.c.l.b16 %v237
    %v415 = vunpack.c.h.b16 %v237
    %v416 = vunpack.c.l.b16 %v238
    %v417 = vunpack.c.h.b16 %v238
    %v418 = vunpack.c.l.b16 %v239
    %v419 = vunpack.c.h.b16 %v239
    %v420 = vunpack.c.l.b16 %v240
    %v421 = vunpack.c.h.b16 %v240
    %v422 = vunpack.c.l.b16 %v241
    %v423 = vunpack.c.h.b16 %v241
    %v424 = vunpack.c.l.b16 %v242
    %v425 = vunpack.c.h.b16 %v242
    %v426 = vunpack.c.l.b16 %v243
    %v427 = vunpack.c.h.b16 %v243
    %v428 = vunpack.c.l.b16 %v244
    %v429 = vunpack.c.h.b16 %v244
    %v430 = vunpack.c.l.b16 %v245
    %v431 = vunpack.c.h.b16 %v245
    %v432 = vunpack.c.l.b16 %v246
    %v433 = vunpack.c.h.b16 %v246
    %v434 = vunpack.c.l.b16 %v247
    %v435 = vunpack.c.h.b16 %v247
    %v436 = vunpack.c.l.b16 %v248
    %v437 = vunpack.c.h.b16 %v248
    %v438 = vunpack.c.l.b16 %v249
    %v439 = vunpack.c.h.b16 %v249
    %v440 = vunpack.c.l.b16 %v250
    %v441 = vunpack.c.h.b16 %v250
    %v442 = vunpack.c.l.b16 %v251
    %v443 = vunpack.c.h.b16 %v251
    %v444 = vpack.c.b16 %v318, %v316
    %v445 = vpack.c.b16 %v319, %v317
    %v446 = vpack.c.b16 %v322, %v320
    %v447 = vpack.c.b16 %v323, %v321
    %v448 = vpack.c.b16 %v326, %v324
    %v449 = vpack.c.b16 %v327, %v325
    %v450 = vpack.c.b16 %v330, %v328
    %v451 = vpack.c.b16 %v331, %v329
    %v452 = vpack.c.b16 %v334, %v332
    %v453 = vpack.c.b16 %v335, %v333
    %v454 = vpack.c.b16 %v338, %v336
    %v455 = vpack.c.b16 %v339, %v337
    %v456 = vpack.c.b16 %v342, %v340
    %v457 = vpack.c.b16 %v343, %v341
    %v458 = vpack.c.b16 %v346, %v344
    %v459 = vpack.c.b16 %v347, %v345
    %v460 = vpack.c.b16 %v350, %v348
    %v461 = vpack.c.b16 %v351, %v349
    %v462 = vpack.c.b16 %v354, %v352
    %v463 = vpack.c.b16 %v355, %v353
    %v464 = vpack.c.b16 %v358, %v356
    %v465 = vpack.c.b16 %v359, %v357
    %v466 = vpack.c.b16 %v362, %v360
    %v467 = vpack.c.b16 %v363, %v361
    %v468 = vpack.c.b16 %v366, %v364
    %v469 = vpack.c.b16 %v367, %v365
    %v470 = vpack.c.b16 %v370, %v368
    %v471 = vpack.c.b16 %v371, %v369
    %v472 = vpack.c.b16 %v374, %v372
    %v473 = vpack.c.b16 %v375, %v373
    %v474 = vpack.c.b16 %v378, %v376
    %v475 = vpack.c.b16 %v379, %v377
    %v476 = vpack.c.b16 %v382, %v380
    %v477 = vpack.c.b16 %v383, %v381
    %v478 = vpack.c.b16 %v386, %v384
    %v479 = vpack.c.b16 %v387, %v385
    %v480 = vpack.c.b16 %v390, %v388
    %v481 = vpack.c.b16 %v391, %v389
    %v482 = vpack.c.b16 %v394, %v392
    %v483 = vpack.c.b16 %v395, %v393
    %v484 = vpack.c.b16 %v398, %v396
    %v485 = vpack.c.b16 %v399, %v397
    %v486 = vpack.c.b16 %v402, %v400
    %v487 = vpack.c.b16 %v403, %v401
    %v488 = vpack.c.b16 %v406, %v404
    %v489 = vpack.c.b16 %v407, %v405
    %v490 = vpack.c.b16 %v410, %v408
    %v491 = vpack.c.b16 %v411, %v409
    %v492 = vpack.c.b16 %v414, %v412
    %v493 = vpack.c.b16 %v415, %v413
    %v494 = vpack.c.b16 %v418, %v416
    %v495 = vpack.c.b16 %v419, %v417
    %v496 = vpack.c.b16 %v422, %v420
    %v497 = vpack.c.b16 %v423, %v421
    %v498 = vpack.c.b16 %v426, %v424
    %v499 = vpack.c.b16 %v427, %v425
    %v500 = vpack.c.b16 %v430, %v428
    %v501 = vpack.c.b16 %v431, %v429
    %v502 = vpack.c.b16 %v434, %v432
    %v503 = vpack.c.b16 %v435, %v433
    %v504 = vpack.c.b16 %v438, %v436
    %v505 = vpack.c.b16 %v439, %v437
    %v506 = vpack.c.b16 %v442, %v440
    %v507 = vpack.c.b16 %v443, %v441
    %572 = vmatprep.subr.bf16.mxu0 %v459
    %573 = vmatpush1.bf16.msra.mxu0 %v458
    %574 = vmatprep.subr.bf16.mxu0 %v457
    %575 = vmatpush1.bf16.msra.mxu0 %v456
    %576 = vmatprep.subr.bf16.mxu0 %v455
    %577 = vmatpush1.bf16.msra.mxu0 %v454
    %578 = vmatprep.subr.bf16.mxu0 %v453
    %579 = vmatpush1.bf16.msra.mxu0 %v452
    %580 = vmatprep.subr.bf16.mxu0 %v451
    %581 = vmatpush1.bf16.msra.mxu0 %v450
    %582 = vmatprep.subr.bf16.mxu0 %v449
    %583 = vmatpush1.bf16.msra.mxu0 %v448
    %584 = vmatprep.subr.bf16.mxu0 %v447
    %585 = vmatpush1.bf16.msra.mxu0 %v446
    %586 = vmatprep.subr.bf16.mxu0 %v445
    %587 = vmatpush1.bf16.msra.mxu0 %v444
    %588 = vmatprep.subr.bf16.mxu0 %v475
    %589 = vmatpush2.bf16.msra.mxu0 %v474
    %590 = vmatprep.subr.bf16.mxu0 %v473
    %591 = vmatpush2.bf16.msra.mxu0 %v472
    %592 = vmatprep.subr.bf16.mxu0 %v471
    %593 = vmatpush2.bf16.msra.mxu0 %v470
    %594 = vmatprep.subr.bf16.mxu0 %v469
    %595 = vmatpush2.bf16.msra.mxu0 %v468
    %596 = vmatprep.subr.bf16.mxu0 %v467
    %597 = vmatpush2.bf16.msra.mxu0 %v466
    %598 = vmatprep.subr.bf16.mxu0 %v465
    %599 = vmatpush2.bf16.msra.mxu0 %v464
    %600 = vmatprep.subr.bf16.mxu0 %v463
    %601 = vmatpush2.bf16.msra.mxu0 %v462
    %602 = vmatprep.subr.bf16.mxu0 %v461
    %603 = vmatpush2.bf16.msra.mxu0 %v460
    %604 = vmatprep.mubr.bf16.mxu0 %v121
    %605 = vmatmul.mubr.bf16.gmra.mxu0 %v120
    %v606 = vpop.f32.mrf.mxu0
    %v607 = vadd.f32 0.0, %v606
    %v608 = vpop.f32.mrf.mxu0
    %v609 = vadd.f32 0.0, %v608
    %v610 = vpop.f32.mrf.mxu0
    %v611 = vpop.f32.mrf.mxu0
    %612 = vdwg.mxu0
    %613 = vmatprep.subr.bf16.mxu0 %v491
    %614 = vmatpush1.bf16.msra.mxu0 %v490
    %615 = vmatprep.subr.bf16.mxu0 %v489
    %616 = vmatpush1.bf16.msra.mxu0 %v488
    %617 = vmatprep.subr.bf16.mxu0 %v487
    %618 = vmatpush1.bf16.msra.mxu0 %v486
    %619 = vmatprep.subr.bf16.mxu0 %v485
    %620 = vmatpush1.bf16.msra.mxu0 %v484
    %621 = vmatprep.subr.bf16.mxu0 %v483
    %622 = vmatpush1.bf16.msra.mxu0 %v482
    %623 = vmatprep.subr.bf16.mxu0 %v481
    %624 = vmatpush1.bf16.msra.mxu0 %v480
    %625 = vmatprep.subr.bf16.mxu0 %v479
    %626 = vmatpush1.bf16.msra.mxu0 %v478
    %627 = vmatprep.subr.bf16.mxu0 %v477
    %628 = vmatpush1.bf16.msra.mxu0 %v476
    %629 = vmatprep.subr.bf16.mxu0 %v507
    %630 = vmatpush2.bf16.msra.mxu0 %v506
    %631 = vmatprep.subr.bf16.mxu0 %v505
    %632 = vmatpush2.bf16.msra.mxu0 %v504
    %633 = vmatprep.subr.bf16.mxu0 %v503
    %634 = vmatpush2.bf16.msra.mxu0 %v502
    %635 = vmatprep.subr.bf16.mxu0 %v501
    %636 = vmatpush2.bf16.msra.mxu0 %v500
    %637 = vmatprep.subr.bf16.mxu0 %v499
    %638 = vmatpush2.bf16.msra.mxu0 %v498
    %639 = vmatprep.subr.bf16.mxu0 %v497
    %640 = vmatpush2.bf16.msra.mxu0 %v496
    %641 = vmatprep.subr.bf16.mxu0 %v495
    %642 = vmatpush2.bf16.msra.mxu0 %v494
    %643 = vmatprep.subr.bf16.mxu0 %v493
    %644 = vmatpush2.bf16.msra.mxu0 %v492
    %645 = vmatprep.mubr.bf16.mxu0 %v123
    %646 = vmatmul.mubr.bf16.gmra.mxu0 %v122
    %v647 = vpop.f32.mrf.mxu0
    %v648 = vadd.f32 %v607, %v647
    %v649 = vpop.f32.mrf.mxu0
    %v650 = vadd.f32 %v609, %v649
    %v651 = vpop.f32.mrf.mxu0
    %v652 = vpop.f32.mrf.mxu0
    %653 = vdwg.mxu0
    %v718 = vunpack.c.l.b16 %v124
    %v719 = vunpack.c.h.b16 %v124
    %v720 = vunpack.c.l.b16 %v125
    %v721 = vunpack.c.h.b16 %v125
    %v722 = vunpack.c.l.b16 %v126
    %v723 = vunpack.c.h.b16 %v126
    %v724 = vunpack.c.l.b16 %v127
    %v725 = vunpack.c.h.b16 %v127
    %v726 = vunpack.c.l.b16 %v128
    %v727 = vunpack.c.h.b16 %v128
    %v728 = vunpack.c.l.b16 %v129
    %v729 = vunpack.c.h.b16 %v129
    %v730 = vunpack.c.l.b16 %v130
    %v731 = vunpack.c.h.b16 %v130
    %v732 = vunpack.c.l.b16 %v131
    %v733 = vunpack.c.h.b16 %v131
    %v734 = vunpack.c.l.b16 %v132
    %v735 = vunpack.c.h.b16 %v132
    %v736 = vunpack.c.l.b16 %v133
    %v737 = vunpack.c.h.b16 %v133
    %v738 = vunpack.c.l.b16 %v134
    %v739 = vunpack.c.h.b16 %v134
    %v740 = vunpack.c.l.b16 %v135
    %v741 = vunpack.c.h.b16 %v135
    %v742 = vunpack.c.l.b16 %v136
    %v743 = vunpack.c.h.b16 %v136
    %v744 = vunpack.c.l.b16 %v137
    %v745 = vunpack.c.h.b16 %v137
    %v746 = vunpack.c.l.b16 %v138
    %v747 = vunpack.c.h.b16 %v138
    %v748 = vunpack.c.l.b16 %v139
    %v749 = vunpack.c.h.b16 %v139
    %v750 = vunpack.c.l.b16 %v140
    %v751 = vunpack.c.h.b16 %v140
    %v752 = vunpack.c.l.b16 %v141
    %v753 = vunpack.c.h.b16 %v141
    %v754 = vunpack.c.l.b16 %v142
    %v755 = vunpack.c.h.b16 %v142
    %v756 = vunpack.c.l.b16 %v143
    %v757 = vunpack.c.h.b16 %v143
    %v758 = vunpack.c.l.b16 %v144
    %v759 = vunpack.c.h.b16 %v144
    %v760 = vunpack.c.l.b16 %v145
    %v761 = vunpack.c.h.b16 %v145
    %v762 = vunpack.c.l.b16 %v146
    %v763 = vunpack.c.h.b16 %v146
    %v764 = vunpack.c.l.b16 %v147
    %v765 = vunpack.c.h.b16 %v147
    %v766 = vunpack.c.l.b16 %v148
    %v767 = vunpack.c.h.b16 %v148
    %v768 = vunpack.c.l.b16 %v149
    %v769 = vunpack.c.h.b16 %v149
    %v770 = vunpack.c.l.b16 %v150
    %v771 = vunpack.c.h.b16 %v150
    %v772 = vunpack.c.l.b16 %v151
    %v773 = vunpack.c.h.b16 %v151
    %v774 = vunpack.c.l.b16 %v152
    %v775 = vunpack.c.h.b16 %v152
    %v776 = vunpack.c.l.b16 %v153
    %v777 = vunpack.c.h.b16 %v153
    %v778 = vunpack.c.l.b16 %v154
    %v779 = vunpack.c.h.b16 %v154
    %v780 = vunpack.c.l.b16 %v155
    %v781 = vunpack.c.h.b16 %v155
    %v782 = vunpack.c.l.b16 %v156
    %v783 = vunpack.c.h.b16 %v156
    %v784 = vunpack.c.l.b16 %v157
    %v785 = vunpack.c.h.b16 %v157
    %v786 = vunpack.c.l.b16 %v158
    %v787 = vunpack.c.h.b16 %v158
    %v788 = vunpack.c.l.b16 %v159
    %v789 = vunpack.c.h.b16 %v159
    %v790 = vunpack.c.l.b16 %v160
    %v791 = vunpack.c.h.b16 %v160
    %v792 = vunpack.c.l.b16 %v161
    %v793 = vunpack.c.h.b16 %v161
    %v794 = vunpack.c.l.b16 %v162
    %v795 = vunpack.c.h.b16 %v162
    %v796 = vunpack.c.l.b16 %v163
    %v797 = vunpack.c.h.b16 %v163
    %v798 = vunpack.c.l.b16 %v164
    %v799 = vunpack.c.h.b16 %v164
    %v800 = vunpack.c.l.b16 %v165
    %v801 = vunpack.c.h.b16 %v165
    %v802 = vunpack.c.l.b16 %v166
    %v803 = vunpack.c.h.b16 %v166
    %v804 = vunpack.c.l.b16 %v167
    %v805 = vunpack.c.h.b16 %v167
    %v806 = vunpack.c.l.b16 %v168
    %v807 = vunpack.c.h.b16 %v168
    %v808 = vunpack.c.l.b16 %v169
    %v809 = vunpack.c.h.b16 %v169
    %v810 = vunpack.c.l.b16 %v170
    %v811 = vunpack.c.h.b16 %v170
    %v812 = vunpack.c.l.b16 %v171
    %v813 = vunpack.c.h.b16 %v171
    %v814 = vunpack.c.l.b16 %v172
    %v815 = vunpack.c.h.b16 %v172
    %v816 = vunpack.c.l.b16 %v173
    %v817 = vunpack.c.h.b16 %v173
    %v818 = vunpack.c.l.b16 %v174
    %v819 = vunpack.c.h.b16 %v174
    %v820 = vunpack.c.l.b16 %v175
    %v821 = vunpack.c.h.b16 %v175
    %v822 = vunpack.c.l.b16 %v176
    %v823 = vunpack.c.h.b16 %v176
    %v824 = vunpack.c.l.b16 %v177
    %v825 = vunpack.c.h.b16 %v177
    %v826 = vunpack.c.l.b16 %v178
    %v827 = vunpack.c.h.b16 %v178
    %v828 = vunpack.c.l.b16 %v179
    %v829 = vunpack.c.h.b16 %v179
    %v830 = vunpack.c.l.b16 %v180
    %v831 = vunpack.c.h.b16 %v180
    %v832 = vunpack.c.l.b16 %v181
    %v833 = vunpack.c.h.b16 %v181
    %v834 = vunpack.c.l.b16 %v182
    %v835 = vunpack.c.h.b16 %v182
    %v836 = vunpack.c.l.b16 %v183
    %v837 = vunpack.c.h.b16 %v183
    %v838 = vunpack.c.l.b16 %v184
    %v839 = vunpack.c.h.b16 %v184
    %v840 = vunpack.c.l.b16 %v185
    %v841 = vunpack.c.h.b16 %v185
    %v842 = vunpack.c.l.b16 %v186
    %v843 = vunpack.c.h.b16 %v186
    %v844 = vunpack.c.l.b16 %v187
    %v845 = vunpack.c.h.b16 %v187
    %v846 = vpack.c.b16 %v720, %v718
    %v847 = vpack.c.b16 %v721, %v719
    %v848 = vpack.c.b16 %v724, %v722
    %v849 = vpack.c.b16 %v725, %v723
    %v850 = vpack.c.b16 %v728, %v726
    %v851 = vpack.c.b16 %v729, %v727
    %v852 = vpack.c.b16 %v732, %v730
    %v853 = vpack.c.b16 %v733, %v731
    %v854 = vpack.c.b16 %v736, %v734
    %v855 = vpack.c.b16 %v737, %v735
    %v856 = vpack.c.b16 %v740, %v738
    %v857 = vpack.c.b16 %v741, %v739
    %v858 = vpack.c.b16 %v744, %v742
    %v859 = vpack.c.b16 %v745, %v743
    %v860 = vpack.c.b16 %v748, %v746
    %v861 = vpack.c.b16 %v749, %v747
    %v862 = vpack.c.b16 %v752, %v750
    %v863 = vpack.c.b16 %v753, %v751
    %v864 = vpack.c.b16 %v756, %v754
    %v865 = vpack.c.b16 %v757, %v755
    %v866 = vpack.c.b16 %v760, %v758
    %v867 = vpack.c.b16 %v761, %v759
    %v868 = vpack.c.b16 %v764, %v762
    %v869 = vpack.c.b16 %v765, %v763
    %v870 = vpack.c.b16 %v768, %v766
    %v871 = vpack.c.b16 %v769, %v767
    %v872 = vpack.c.b16 %v772, %v770
    %v873 = vpack.c.b16 %v773, %v771
    %v874 = vpack.c.b16 %v776, %v774
    %v875 = vpack.c.b16 %v777, %v775
    %v876 = vpack.c.b16 %v780, %v778
    %v877 = vpack.c.b16 %v781, %v779
    %v878 = vpack.c.b16 %v784, %v782
    %v879 = vpack.c.b16 %v785, %v783
    %v880 = vpack.c.b16 %v788, %v786
    %v881 = vpack.c.b16 %v789, %v787
    %v882 = vpack.c.b16 %v792, %v790
    %v883 = vpack.c.b16 %v793, %v791
    %v884 = vpack.c.b16 %v796, %v794
    %v885 = vpack.c.b16 %v797, %v795
    %v886 = vpack.c.b16 %v800, %v798
    %v887 = vpack.c.b16 %v801, %v799
    %v888 = vpack.c.b16 %v804, %v802
    %v889 = vpack.c.b16 %v805, %v803
    %v890 = vpack.c.b16 %v808, %v806
    %v891 = vpack.c.b16 %v809, %v807
    %v892 = vpack.c.b16 %v812, %v810
    %v893 = vpack.c.b16 %v813, %v811
    %v894 = vpack.c.b16 %v816, %v814
    %v895 = vpack.c.b16 %v817, %v815
    %v896 = vpack.c.b16 %v820, %v818
    %v897 = vpack.c.b16 %v821, %v819
    %v898 = vpack.c.b16 %v824, %v822
    %v899 = vpack.c.b16 %v825, %v823
    %v900 = vpack.c.b16 %v828, %v826
    %v901 = vpack.c.b16 %v829, %v827
    %v902 = vpack.c.b16 %v832, %v830
    %v903 = vpack.c.b16 %v833, %v831
    %v904 = vpack.c.b16 %v836, %v834
    %v905 = vpack.c.b16 %v837, %v835
    %v906 = vpack.c.b16 %v840, %v838
    %v907 = vpack.c.b16 %v841, %v839
    %v908 = vpack.c.b16 %v844, %v842
    %v909 = vpack.c.b16 %v845, %v843
    %974 = vmatprep.subr.bf16.mxu0 %v861
    %975 = vmatpush1.bf16.msra.mxu0 %v860
    %976 = vmatprep.subr.bf16.mxu0 %v859
    %977 = vmatpush1.bf16.msra.mxu0 %v858
    %978 = vmatprep.subr.bf16.mxu0 %v857
    %979 = vmatpush1.bf16.msra.mxu0 %v856
    %980 = vmatprep.subr.bf16.mxu0 %v855
    %981 = vmatpush1.bf16.msra.mxu0 %v854
    %982 = vmatprep.subr.bf16.mxu0 %v853
    %983 = vmatpush1.bf16.msra.mxu0 %v852
    %984 = vmatprep.subr.bf16.mxu0 %v851
    %985 = vmatpush1.bf16.msra.mxu0 %v850
    %986 = vmatprep.subr.bf16.mxu0 %v849
    %987 = vmatpush1.bf16.msra.mxu0 %v848
    %988 = vmatprep.subr.bf16.mxu0 %v847
    %989 = vmatpush1.bf16.msra.mxu0 %v846
    %990 = vmatprep.subr.bf16.mxu0 %v877
    %991 = vmatpush2.bf16.msra.mxu0 %v876
    %992 = vmatprep.subr.bf16.mxu0 %v875
    %993 = vmatpush2.bf16.msra.mxu0 %v874
    %994 = vmatprep.subr.bf16.mxu0 %v873
    %995 = vmatpush2.bf16.msra.mxu0 %v872
    %996 = vmatprep.subr.bf16.mxu0 %v871
    %997 = vmatpush2.bf16.msra.mxu0 %v870
    %998 = vmatprep.subr.bf16.mxu0 %v869
    %999 = vmatpush2.bf16.msra.mxu0 %v868
    %1000 = vmatprep.subr.bf16.mxu0 %v867
    %1001 = vmatpush2.bf16.msra.mxu0 %v866
    %1002 = vmatprep.subr.bf16.mxu0 %v865
    %1003 = vmatpush2.bf16.msra.mxu0 %v864
    %1004 = vmatprep.subr.bf16.mxu0 %v863
    %1005 = vmatpush2.bf16.msra.mxu0 %v862
    %1006 = vmatprep.mubr.bf16.mxu0 %v113
    %1007 = vmatmul.mubr.bf16.gmra.mxu0 %v112
    %v1008 = vpop.f32.mrf.mxu0
    %v1009 = vadd.f32 %v648, %v1008
    %v1010 = vpop.f32.mrf.mxu0
    %v1011 = vadd.f32 %v650, %v1010
    %v1012 = vpop.f32.mrf.mxu0
    %v1013 = vpop.f32.mrf.mxu0
    %1014 = vdwg.mxu0
    %1015 = vmatprep.subr.bf16.mxu0 %v893
    %1016 = vmatpush1.bf16.msra.mxu0 %v892
    %1017 = vmatprep.subr.bf16.mxu0 %v891
    %1018 = vmatpush1.bf16.msra.mxu0 %v890
    %1019 = vmatprep.subr.bf16.mxu0 %v889
    %1020 = vmatpush1.bf16.msra.mxu0 %v888
    %1021 = vmatprep.subr.bf16.mxu0 %v887
    %1022 = vmatpush1.bf16.msra.mxu0 %v886
    %1023 = vmatprep.subr.bf16.mxu0 %v885
    %1024 = vmatpush1.bf16.msra.mxu0 %v884
    %1025 = vmatprep.subr.bf16.mxu0 %v883
    %1026 = vmatpush1.bf16.msra.mxu0 %v882
    %1027 = vmatprep.subr.bf16.mxu0 %v881
    %1028 = vmatpush1.bf16.msra.mxu0 %v880
    %1029 = vmatprep.subr.bf16.mxu0 %v879
    %1030 = vmatpush1.bf16.msra.mxu0 %v878
    %1031 = vmatprep.subr.bf16.mxu0 %v909
    %1032 = vmatpush2.bf16.msra.mxu0 %v908
    %1033 = vmatprep.subr.bf16.mxu0 %v907
    %1034 = vmatpush2.bf16.msra.mxu0 %v906
    %1035 = vmatprep.subr.bf16.mxu0 %v905
    %1036 = vmatpush2.bf16.msra.mxu0 %v904
    %1037 = vmatprep.subr.bf16.mxu0 %v903
    %1038 = vmatpush2.bf16.msra.mxu0 %v902
    %1039 = vmatprep.subr.bf16.mxu0 %v901
    %1040 = vmatpush2.bf16.msra.mxu0 %v900
    %1041 = vmatprep.subr.bf16.mxu0 %v899
    %1042 = vmatpush2.bf16.msra.mxu0 %v898
    %1043 = vmatprep.subr.bf16.mxu0 %v897
    %1044 = vmatpush2.bf16.msra.mxu0 %v896
    %1045 = vmatprep.subr.bf16.mxu0 %v895
    %1046 = vmatpush2.bf16.msra.mxu0 %v894
    %1047 = vmatprep.mubr.bf16.mxu0 %v115
    %1048 = vmatmul.mubr.bf16.gmra.mxu0 %v114
    %v1049 = vpop.f32.mrf.mxu0
    %v1050 = vadd.f32 %v1009, %v1049
    %v1051 = vpop.f32.mrf.mxu0
    %v1052 = vadd.f32 %v1011, %v1051
    %v1053 = vpop.f32.mrf.mxu0
    %v1054 = vpop.f32.mrf.mxu0
    %1055 = vdwg.mxu0
    %v1056 = vld [vmem:[#allocation7] sm:$0x3]
    %v1058 = vlaneseq
    %v1059 = vshrl.u32 %v1058, 7
    %v1060 = vsub.s32 0, %v1059
    %v1061 = vrot.slane %v1056, %v1060
    %v1062 = vlaneseq
    %v1063 = vshrl.u32 %v1062, 7
    %v1064 = vsub.s32 1, %v1063
    %v1065 = vrot.slane %v1056, %v1064
    %v1068 = vadd.f32 %v1050, %v1061
    %v1069 = vadd.f32 %v1052, %v1065
    %v1070 = vrot.slane %v1068, 4
    %v1071 = vadd.f32 %v1068, %v1070
    %v1072 = vrot.slane %v1071, 2
    %v1073 = vadd.f32 %v1071, %v1072
    %v1074 = vrot.slane %v1073, 1
    %v1075 = vadd.f32 %v1073, %v1074
    %v1076 = vrot.slane %v1069, 4
    %v1077 = vadd.f32 %v1069, %v1076
    %v1078 = vrot.slane %v1077, 2
    %v1079 = vadd.f32 %v1077, %v1078
    %v1080 = vrot.slane %v1079, 1
    %v1081 = vadd.f32 %v1079, %v1080
    %v1082 = vmul.f32 %v1075, 0.125
    %v1083 = vmul.f32 %v1081, 0.125
    %v1084 = vsub.f32 %v1068, %v1082
    %v1085 = vsub.f32 %v1069, %v1083
    %v1086 = vmul.f32 %v1084, %v1084
    %v1087 = vmul.f32 %v1085, %v1085
    %v1088 = vrot.slane %v1086, 4
    %v1089 = vadd.f32 %v1086, %v1088
    %v1090 = vrot.slane %v1089, 2
    %v1091 = vadd.f32 %v1089, %v1090
    %v1092 = vrot.slane %v1091, 1
    %v1093 = vadd.f32 %v1091, %v1092
    %v1094 = vrot.slane %v1087, 4
    %v1095 = vadd.f32 %v1087, %v1094
    %v1096 = vrot.slane %v1095, 2
    %v1097 = vadd.f32 %v1095, %v1096
    %v1098 = vrot.slane %v1097, 1
    %v1099 = vadd.f32 %v1097, %v1098
    %v1100 = vmul.f32 %v1093, 0.125
    %v1101 = vmul.f32 %v1099, 0.125
    %v1102 = vld [vmem:[#allocation8] sm:$0x3]
    %v1103 = vadd.f32 %v1100, 1e-05
    %v1104 = vadd.f32 %v1101, 1e-05
    %v1105 = vrsqrt.pop %v1103
    %v1106 = vrsqrt.pop %v1104
    %v1109 = vcombine.low %v1105, %v1106
    %v1111 = vunpack.c.l.s4 1966171168
    %v1112 = vunpack.c.0.s8 %v1111
    %v1113 = vlaneseq
    %v1114 = vshrl.u32 %v1113, 7
    %v1115 = vsub.s32 %v1112, %v1114
    %v1116 = vrot.slane %v1109, %v1115
    %v1118 = vunpack.c.l.s4 1966171168
    %v1119 = vunpack.c.0.s8 %v1118
    %v1120 = vlaneseq
    %v1121 = vshrl.u32 %v1120, 7
    %v1122 = vsub.s32 %v1119, %v1121
    %v1123 = vrot.slane %v1116, %v1122
    %v1125 = vmul.f32 %v1102, %v1123
    %v1127 = vlaneseq
    %v1128 = vshrl.u32 %v1127, 7
    %v1129 = vsub.s32 0, %v1128
    %v1130 = vrot.slane %v1125, %v1129
    %v1131 = vlaneseq
    %v1132 = vshrl.u32 %v1131, 7
    %v1133 = vsub.s32 1, %v1132
    %v1134 = vrot.slane %v1125, %v1133
    %v1137 = vmul.f32 %v1084, %v1130
    %v1138 = vmul.f32 %v1085, %v1134
    %v1139 = vld [vmem:[#allocation10] sm:$0x3]
    %v1141 = vlaneseq
    %v1142 = vshrl.u32 %v1141, 7
    %v1143 = vsub.s32 0, %v1142
    %v1144 = vrot.slane %v1139, %v1143
    %v1145 = vlaneseq
    %v1146 = vshrl.u32 %v1145, 7
    %v1147 = vsub.s32 1, %v1146
    %v1148 = vrot.slane %v1139, %v1147
    %v1151 = vadd.f32 %v1137, %v1144
    %v1152 = vadd.f32 %v1138, %v1148
    %v1153 = vmax.f32 %v1151, 0.0
    %v1154 = vmax.f32 %v1152, 0.0
    %v1155 = vpack.c.bf16 %v1153, %v1153
    %v1156 = vpack.c.bf16 %v1154, %v1154
    %v1157 = vld [vmem:[%s7] sm:$0xf]
    %v1158 = vld [vmem:[%s7 + $0x4] sm:$0xf]
    %v1159 = vld [vmem:[%s7 + $0x8] sm:$0xf]
    %v1160 = vld [vmem:[%s7 + $0xc] sm:$0xf]
    %v1161 = vld [vmem:[%s7 + $0x10] sm:$0xf]
    %v1162 = vld [vmem:[%s7 + $0x14] sm:$0xf]
    %v1163 = vld [vmem:[%s7 + $0x18] sm:$0xf]
    %v1164 = vld [vmem:[%s7 + $0x1c] sm:$0xf]
    %v1165 = vld [vmem:[%s7 + $0x20] sm:$0xf]
    %v1166 = vld [vmem:[%s7 + $0x24] sm:$0xf]
    %v1167 = vld [vmem:[%s7 + $0x28] sm:$0xf]
    %v1168 = vld [vmem:[%s7 + $0x2c] sm:$0xf]
    %v1169 = vld [vmem:[%s7 + $0x30] sm:$0xf]
    %v1170 = vld [vmem:[%s7 + $0x34] sm:$0xf]
    %v1171 = vld [vmem:[%s7 + $0x38] sm:$0xf]
    %v1172 = vld [vmem:[%s7 + $0x3c] sm:$0xf]
    %v1173 = vld [vmem:[%s7 + $0x40] sm:$0xf]
    %v1174 = vld [vmem:[%s7 + $0x44] sm:$0xf]
    %v1175 = vld [vmem:[%s7 + $0x48] sm:$0xf]
    %v1176 = vld [vmem:[%s7 + $0x4c] sm:$0xf]
    %v1177 = vld [vmem:[%s7 + $0x50] sm:$0xf]
    %v1178 = vld [vmem:[%s7 + $0x54] sm:$0xf]
    %v1179 = vld [vmem:[%s7 + $0x58] sm:$0xf]
    %v1180 = vld [vmem:[%s7 + $0x5c] sm:$0xf]
    %v1181 = vld [vmem:[%s7 + $0x60] sm:$0xf]
    %v1182 = vld [vmem:[%s7 + $0x64] sm:$0xf]
    %v1183 = vld [vmem:[%s7 + $0x68] sm:$0xf]
    %v1184 = vld [vmem:[%s7 + $0x6c] sm:$0xf]
    %v1185 = vld [vmem:[%s7 + $0x70] sm:$0xf]
    %v1186 = vld [vmem:[%s7 + $0x74] sm:$0xf]
    %v1187 = vld [vmem:[%s7 + $0x78] sm:$0xf]
    %v1188 = vld [vmem:[%s7 + $0x7c] sm:$0xf]
    %v1189 = vld [vmem:[#allocation11] sm:$0x1]
    %v1191 = vlaneseq
    %v1192 = vshrl.u32 %v1191, 7
    %v1193 = vsub.s32 0, %v1192
    %v1194 = vrot.slane %v1189, %v1193
    %v1228 = vunpack.c.l.b16 %v1157
    %v1229 = vunpack.c.l.b16 %v1158
    %v1230 = vunpack.c.l.b16 %v1159
    %v1231 = vunpack.c.l.b16 %v1160
    %v1232 = vunpack.c.l.b16 %v1161
    %v1233 = vunpack.c.l.b16 %v1162
    %v1234 = vunpack.c.l.b16 %v1163
    %v1235 = vunpack.c.l.b16 %v1164
    %v1236 = vunpack.c.l.b16 %v1165
    %v1237 = vunpack.c.l.b16 %v1166
    %v1238 = vunpack.c.l.b16 %v1167
    %v1239 = vunpack.c.l.b16 %v1168
    %v1240 = vunpack.c.l.b16 %v1169
    %v1241 = vunpack.c.l.b16 %v1170
    %v1242 = vunpack.c.l.b16 %v1171
    %v1243 = vunpack.c.l.b16 %v1172
    %v1244 = vunpack.c.l.b16 %v1173
    %v1245 = vunpack.c.l.b16 %v1174
    %v1246 = vunpack.c.l.b16 %v1175
    %v1247 = vunpack.c.l.b16 %v1176
    %v1248 = vunpack.c.l.b16 %v1177
    %v1249 = vunpack.c.l.b16 %v1178
    %v1250 = vunpack.c.l.b16 %v1179
    %v1251 = vunpack.c.l.b16 %v1180
    %v1252 = vunpack.c.l.b16 %v1181
    %v1253 = vunpack.c.l.b16 %v1182
    %v1254 = vunpack.c.l.b16 %v1183
    %v1255 = vunpack.c.l.b16 %v1184
    %v1256 = vunpack.c.l.b16 %v1185
    %v1257 = vunpack.c.l.b16 %v1186
    %v1258 = vunpack.c.l.b16 %v1187
    %v1259 = vunpack.c.l.b16 %v1188
    %v1260 = vpack.c.b16 %v1229, %v1228
    %v1261 = vpack.c.b16 %v1231, %v1230
    %v1262 = vpack.c.b16 %v1233, %v1232
    %v1263 = vpack.c.b16 %v1235, %v1234
    %v1264 = vpack.c.b16 %v1237, %v1236
    %v1265 = vpack.c.b16 %v1239, %v1238
    %v1266 = vpack.c.b16 %v1241, %v1240
    %v1267 = vpack.c.b16 %v1243, %v1242
    %v1268 = vpack.c.b16 %v1245, %v1244
    %v1269 = vpack.c.b16 %v1247, %v1246
    %v1270 = vpack.c.b16 %v1249, %v1248
    %v1271 = vpack.c.b16 %v1251, %v1250
    %v1272 = vpack.c.b16 %v1253, %v1252
    %v1273 = vpack.c.b16 %v1255, %v1254
    %v1274 = vpack.c.b16 %v1257, %v1256
    %v1275 = vpack.c.b16 %v1259, %v1258
    %1292 = vmatprep.subr.bf16.mxu0 0
    %1293 = vmatpush1.bf16.msra.mxu0 %v1267
    %1294 = vmatprep.subr.bf16.mxu0 0
    %1295 = vmatpush1.bf16.msra.mxu0 %v1266
    %1296 = vmatprep.subr.bf16.mxu0 0
    %1297 = vmatpush1.bf16.msra.mxu0 %v1265
    %1298 = vmatprep.subr.bf16.mxu0 0
    %1299 = vmatpush1.bf16.msra.mxu0 %v1264
    %1300 = vmatprep.subr.bf16.mxu0 0
    %1301 = vmatpush1.bf16.msra.mxu0 %v1263
    %1302 = vmatprep.subr.bf16.mxu0 0
    %1303 = vmatpush1.bf16.msra.mxu0 %v1262
    %1304 = vmatprep.subr.bf16.mxu0 0
    %1305 = vmatpush1.bf16.msra.mxu0 %v1261
    %1306 = vmatprep.subr.bf16.mxu0 0
    %1307 = vmatpush1.bf16.msra.mxu0 %v1260
    %1308 = vmatprep.subr.bf16.mxu0 0
    %1309 = vmatpush2.bf16.msra.mxu0 %v1275
    %1310 = vmatprep.subr.bf16.mxu0 0
    %1311 = vmatpush2.bf16.msra.mxu0 %v1274
    %1312 = vmatprep.subr.bf16.mxu0 0
    %1313 = vmatpush2.bf16.msra.mxu0 %v1273
    %1314 = vmatprep.subr.bf16.mxu0 0
    %1315 = vmatpush2.bf16.msra.mxu0 %v1272
    %1316 = vmatprep.subr.bf16.mxu0 0
    %1317 = vmatpush2.bf16.msra.mxu0 %v1271
    %1318 = vmatprep.subr.bf16.mxu0 0
    %1319 = vmatpush2.bf16.msra.mxu0 %v1270
    %1320 = vmatprep.subr.bf16.mxu0 0
    %1321 = vmatpush2.bf16.msra.mxu0 %v1269
    %1322 = vmatprep.subr.bf16.mxu0 0
    %1323 = vmatpush2.bf16.msra.mxu0 %v1268
    %1324 = vmatprep.mubr.bf16.mxu0 %v1156
    %1325 = vmatmul.mubr.bf16.gmra.mxu0 %v1155
    %v1326 = vpop.f32.mrf.mxu0
    %v1327 = vadd.f32 %v1194, %v1326
    %v1328 = vpop.f32.mrf.mxu0
    %v1329 = vpop.f32.mrf.mxu0
    %v1330 = vpop.f32.mrf.mxu0
    %1331 = vdwg.mxu0
    %vm1332 = vcmask 326656
    %1333 = vst.msk [vmem:[#allocation13] sm:$0xff] %vm1332, %v1327
    // Predicated region
    $region62: #{semi3d_forward.1} parent=1 // pred_check
      _
    $region63: #{semi3d_forward.1} parent=1 // pred_check_branch
      %1335 = sbr.rel (0) target = $region65
    $region64: #{semi3d_forward.1} parent=1 // pred_region
      %s1337 = ssub.s32 128, 128
      %1338 = vsyncadd [#allocation4], %s1337
      %s1340 = sshll.u32 [#allocation13], 4
      %s1341 = int_to_ptr.vmem [resolvable:$true] %s1340
      %1343 = dma.vmem_to_hbm [thread:$0]  %s1341, 128, %s9, [#allocation4]
    $region65: #{semi3d_forward.1} parent=1 // pred_fallthru
      _
    // Predicated region
    $region66: #{semi3d_forward.1} parent=1 // pred_check
      _
    $region67: #{semi3d_forward.1} parent=1 // pred_check_branch
      %1345 = sbr.rel (0) target = $region69
    $region68: #{semi3d_forward.1} parent=1 // pred_region
      %1346 = dma.done [#allocation4], 128
    $region69: #{semi3d_forward.1} parent=1 // pred_fallthru
      _
    %1347 = vsyncpa [#allocation3], 1
    %1348 = vsyncpa [#allocation6], 1
    %1349 = vsyncpa [#allocation9], 1
    %1350 = vsyncpa [#allocation12], 1
    %1351 = vsyncpa [#allocation4], 1

</llo_original>
